<compile_context>
chip_gen: v7x
topology: tpu7x:2x2x1
jax: 0.10.0
libtpu: 0.0.40
codegen_flags: <defaults>
</compile_context>

<pallas_src>
import jax
import jax.numpy as jnp
from jax.experimental import pallas as pl
from jax.experimental.pallas import tpu as pltpu


# ---------------------------------------------------------------------------
# Pallas kernel: fused 2x2-average downsample + 1x1 conv (no bias), NCHW layout
# ---------------------------------------------------------------------------

def _make_downsample_kernel(th, W, Wo, Cin, Cout):
    """th: output rows per strip (multiple of 8 unless Ho<8), W/Wo: in/out width."""

    def kernel(x_ref, s_ref, w_ref, o_ref):
        # x_ref : (1, Cin, th, 2*W)  reshaped NCHW rows: [row 2h | row 2h+1] along lanes
        # s_ref : (W, Wo)            horizontal pool/compact matrix (0.25 at rows 2j,2j+1)
        # w_ref : (Cout, Cin)        1x1 conv weights in SMEM (scalar reads)
        # o_ref : (1, Cout, th, Wo)  NCHW output block, lane = Wo (dense stores)
        x = x_ref[0].astype(jnp.float32)                  # (Cin, th, 2W)
        v = x[:, :, :W] + x[:, :, W:]                     # vertical pair sum (Cin, th, W)
        v2 = v.reshape(Cin * th, W)                       # layout-free when th % 8 == 0
        pooled = jnp.dot(v2, s_ref[...].astype(jnp.float32),
                         preferred_element_type=jnp.float32)   # (Cin*th, Wo) = 2x2 avg
        pooled = pooled.reshape(Cin, th, Wo)              # layout-free when th % 8 == 0
        # 1x1 conv over tiny channel dims: VPU scalar-weighted sums, lane-dense on Wo.
        for co in range(Cout):
            acc = w_ref[co, 0] * pooled[0]
            for ci in range(1, Cin):
                acc = acc + w_ref[co, ci] * pooled[ci]
            o_ref[0, co] = acc.astype(o_ref.dtype)

    return kernel


def _pick_strip_rows(Ho, W, Cin, Cout, batch, itemsize=4, vmem_budget=12 << 20):
    """Output rows per strip: multiple of 8, sized to a generation-safe VMEM budget.

    Budget accounts for double-buffered input/output blocks, ~1x input block of in-kernel
    intermediates, and the (deduped, double-buffered) selection matrix. 12 MiB keeps us
    under v5e's 16 MiB scoped default; on v6e/v7x a larger budget can be passed.
    """
    if Ho <= 8:
        return Ho                                   # block dim == full array dim
    Wo = W // 2
    sel_bytes = 2 * W * Wo * 4
    per_row = (3 * Cin * 2 * W + 2 * Cout * Wo) * itemsize
    budget = max(vmem_budget - sel_bytes, 1 << 20)
    th = max(8, min(budget // per_row, Ho) // 8 * 8)
    # v7x megacore: keep >= 2 grid cells when batch == 1 so both TensorCores get work.
    if batch == 1 and th >= Ho and Ho >= 16:
        th = max(8, (Ho // 2 // 8) * 8)
    return th


def downsample_nchw(x, w):
    """x: (B, Cin, H, W) NCHW; w: (Cout, Cin). Returns (B, Cout, H/2, W/2) NCHW."""
    B, Cin, H, W = x.shape
    Cout = w.shape[0]
    assert H % 2 == 0 and W % 2 == 0, "even spatial dims required"
    # TODO(synk): odd spatial sizes (PyTorch floors H*0.5 and drops last row/col) not handled.
    Ho, Wo = H // 2, W // 2

    # Free HBM reshape: pack the vertical row pair back-to-back along the last (lane) dim.
    xr = x.reshape(B, Cin, Ho, 2 * W)
    # Horizontal pair-average + compaction as a matmul: S[j, jo] = 0.25 * (j//2 == jo).
    sel = (jnp.arange(W)[:, None] // 2) == jnp.arange(Wo)[None, :]
    S = (0.25 * sel).astype(jnp.float32)
    w2 = w.astype(jnp.float32)

    th = _pick_strip_rows(Ho, W, Cin, Cout, B)
    n_strips = pl.cdiv(Ho, th)                       # ragged last strip handled by Pallas
    kernel = _make_downsample_kernel(th, W, Wo, Cin, Cout)

    return pl.pallas_call(
        kernel,
        out_shape=jax.ShapeDtypeStruct((B, Cout, Ho, Wo), x.dtype),
        grid=(B, n_strips),
        in_specs=[
            pl.BlockSpec((1, Cin, th, 2 * W), lambda b, i: (b, 0, i, 0)),
            pl.BlockSpec((W, Wo), lambda b, i: (0, 0)),      # constant index -> fetched once
            pl.BlockSpec(memory_space=pltpu.MemorySpace.SMEM),
        ],
        out_specs=pl.BlockSpec((1, Cout, th, Wo), lambda b, i: (b, 0, i, 0)),
        compiler_params=pltpu.CompilerParams(
            dimension_semantics=("parallel", "parallel")),
    )(xr, S, w2)


# ---------------------------------------------------------------------------
# Module-level wrapper matching the PyTorch NCHW interface
# ---------------------------------------------------------------------------

def downsample_forward_nchw(x_nchw, w_pt):
    """x_nchw: (B, Cin, H, W); w_pt: (Cout, Cin, 1, 1) PyTorch Conv2d weight (bias=False)."""
    w2d = w_pt[:, :, 0, 0]                                   # (Cout, Cin)
    return downsample_nchw(x_nchw, w2d)


# ---------------------------------------------------------------------------
# Main
# ---------------------------------------------------------------------------

if __name__ == "__main__":
    B, Cin, H, W = 2, 4, 16, 16
    s_factor = 4
    Cout = Cin + s_factor

    key = jax.random.PRNGKey(0)
    kx, kw = jax.random.split(key)
    x = jax.random.normal(kx, (B, Cin, H, W), dtype=jnp.float32)
    w = jax.random.normal(kw, (Cout, Cin, 1, 1), dtype=jnp.float32) * 0.1

    out = downsample_forward_nchw(x, w)
    out = jax.block_until_ready(out)
    assert out.shape == (B, Cout, H // 2, W // 2)

    # Reference: bilinear 0.5x (align_corners=False, even dims) == 2x2 avg pool, then 1x1 conv.
    xa = 0.25 * (x[:, :, 0::2, 0::2] + x[:, :, 1::2, 0::2]
                 + x[:, :, 0::2, 1::2] + x[:, :, 1::2, 1::2])
    ref = jnp.einsum('oc,bchw->bohw', w[:, :, 0, 0], xa)
    err = float(jnp.max(jnp.abs(out - ref)))
    assert jnp.allclose(out, ref, atol=1e-4, rtol=1e-4), f"max abs err {err}"

    print("KERNEL_OK")
</pallas_src>

<mosaic_0001>
module attributes {stable_mosaic.version = 11 : i64} {
  func.func @kernel(%arg0: i32, %arg1: i32, %arg2: memref<1x4x8x32xf32, #tpu.memory_space<vmem>>, %arg3: memref<16x8xf32, #tpu.memory_space<vmem>>, %arg4: memref<8x4xf32, #tpu.memory_space<smem>>, %arg5: memref<1x8x8x8xf32, #tpu.memory_space<vmem>>) attributes {dimension_semantics = [#tpu.dimension_semantics<parallel>, #tpu.dimension_semantics<parallel>], iteration_bounds = array<i64: 2, 1>, scalar_prefetch = 0 : i64, scratch_operands = 0 : i64, tpu.core_type = #tpu.core_type<tc>, window_params = [{transform_indices = @transform_0, window_bounds = array<i64: 1, 4, 8, 32>}, {pipeline_mode = #tpu.pipeline_mode<synchronous>, transform_indices = @transform_1, window_bounds = array<i64: 16, 8>}, {transform_indices = @transform_2, window_bounds = array<i64: 8, 4>}, {transform_indices = @transform_3, window_bounds = array<i64: 1, 8, 8, 8>}]} {
    %c0 = arith.constant 0 : index
    %c0_0 = arith.constant 0 : index
    %c0_1 = arith.constant 0 : index
    %c0_2 = arith.constant 0 : index
    %0 = vector.load %arg2[%c0, %c0_0, %c0_1, %c0_2] : memref<1x4x8x32xf32, #tpu.memory_space<vmem>>, vector<1x4x8x32xf32>
    %1 = vector.shape_cast %0 : vector<1x4x8x32xf32> to vector<4x8x32xf32>
    %2 = vector.extract_strided_slice %1 {offsets = [0, 0, 0], sizes = [4, 8, 16], strides = [1, 1, 1]} : vector<4x8x32xf32> to vector<4x8x16xf32>
    %3 = vector.extract_strided_slice %1 {offsets = [0, 0, 16], sizes = [4, 8, 16], strides = [1, 1, 1]} : vector<4x8x32xf32> to vector<4x8x16xf32>
    %4 = arith.addf %2, %3 : vector<4x8x16xf32>
    %5 = vector.shape_cast %4 : vector<4x8x16xf32> to vector<32x16xf32>
    %c0_3 = arith.constant 0 : index
    %c0_4 = arith.constant 0 : index
    %6 = vector.load %arg3[%c0_3, %c0_4] : memref<16x8xf32, #tpu.memory_space<vmem>>, vector<16x8xf32>
    %cst = arith.constant dense<0.000000e+00> : vector<32x8xf32>
    %7 = tpu.matmul %5, %6, %cst {dimension_numbers = #tpu.dot_dimension_numbers<[1], [0], [0], [1], [0, 0, 1, 1], [], []>} : vector<32x16xf32>, vector<16x8xf32>, vector<32x8xf32> -> vector<32x8xf32>
    %8 = vector.shape_cast %7 : vector<32x8xf32> to vector<4x8x8xf32>
    %c0_5 = arith.constant 0 : index
    %c0_6 = arith.constant 0 : index
    %9 = memref.load %arg4[%c0_5, %c0_6] : memref<8x4xf32, #tpu.memory_space<smem>>
    %10 = vector.extract_strided_slice %8 {offsets = [0, 0, 0], sizes = [1, 8, 8], strides = [1, 1, 1]} : vector<4x8x8xf32> to vector<1x8x8xf32>
    %11 = vector.shape_cast %10 : vector<1x8x8xf32> to vector<8x8xf32>
    %12 = vector.broadcast %9 : f32 to vector<8x8xf32>
    %13 = arith.mulf %12, %11 : vector<8x8xf32>
    %c0_7 = arith.constant 0 : index
    %c1 = arith.constant 1 : index
    %14 = memref.load %arg4[%c0_7, %c1] : memref<8x4xf32, #tpu.memory_space<smem>>
    %15 = vector.extract_strided_slice %8 {offsets = [1, 0, 0], sizes = [1, 8, 8], strides = [1, 1, 1]} : vector<4x8x8xf32> to vector<1x8x8xf32>
    %16 = vector.shape_cast %15 : vector<1x8x8xf32> to vector<8x8xf32>
    %17 = vector.broadcast %14 : f32 to vector<8x8xf32>
    %18 = arith.mulf %17, %16 : vector<8x8xf32>
    %19 = arith.addf %13, %18 : vector<8x8xf32>
    %c0_8 = arith.constant 0 : index
    %c2 = arith.constant 2 : index
    %20 = memref.load %arg4[%c0_8, %c2] : memref<8x4xf32, #tpu.memory_space<smem>>
    %21 = vector.extract_strided_slice %8 {offsets = [2, 0, 0], sizes = [1, 8, 8], strides = [1, 1, 1]} : vector<4x8x8xf32> to vector<1x8x8xf32>
    %22 = vector.shape_cast %21 : vector<1x8x8xf32> to vector<8x8xf32>
    %23 = vector.broadcast %20 : f32 to vector<8x8xf32>
    %24 = arith.mulf %23, %22 : vector<8x8xf32>
    %25 = arith.addf %19, %24 : vector<8x8xf32>
    %c0_9 = arith.constant 0 : index
    %c3 = arith.constant 3 : index
    %26 = memref.load %arg4[%c0_9, %c3] : memref<8x4xf32, #tpu.memory_space<smem>>
    %27 = vector.extract_strided_slice %8 {offsets = [3, 0, 0], sizes = [1, 8, 8], strides = [1, 1, 1]} : vector<4x8x8xf32> to vector<1x8x8xf32>
    %28 = vector.shape_cast %27 : vector<1x8x8xf32> to vector<8x8xf32>
    %29 = vector.broadcast %26 : f32 to vector<8x8xf32>
    %30 = arith.mulf %29, %28 : vector<8x8xf32>
    %31 = arith.addf %25, %30 : vector<8x8xf32>
    %c0_10 = arith.constant 0 : index
    %c0_11 = arith.constant 0 : index
    %c0_12 = arith.constant 0 : index
    %c0_13 = arith.constant 0 : index
    %32 = vector.load %arg5[%c0_10, %c0_11, %c0_12, %c0_13] : memref<1x8x8x8xf32, #tpu.memory_space<vmem>>, vector<1x1x8x8xf32>
    %33 = vector.shape_cast %32 : vector<1x1x8x8xf32> to vector<8x8xf32>
    %34 = vector.shape_cast %31 : vector<8x8xf32> to vector<1x1x8x8xf32>
    tpu.vector_store %arg5[%c0_10, %c0_11, %c0_12, %c0_13], %34 {strides = array<i32>} : memref<1x8x8x8xf32, #tpu.memory_space<vmem>>, vector<1x1x8x8xf32>,
    %c1_14 = arith.constant 1 : index
    %c0_15 = arith.constant 0 : index
    %35 = memref.load %arg4[%c1_14, %c0_15] : memref<8x4xf32, #tpu.memory_space<smem>>
    %36 = vector.extract_strided_slice %8 {offsets = [0, 0, 0], sizes = [1, 8, 8], strides = [1, 1, 1]} : vector<4x8x8xf32> to vector<1x8x8xf32>
    %37 = vector.shape_cast %36 : vector<1x8x8xf32> to vector<8x8xf32>
    %38 = vector.broadcast %35 : f32 to vector<8x8xf32>
    %39 = arith.mulf %38, %37 : vector<8x8xf32>
    %c1_16 = arith.constant 1 : index
    %c1_17 = arith.constant 1 : index
    %40 = memref.load %arg4[%c1_16, %c1_17] : memref<8x4xf32, #tpu.memory_space<smem>>
    %41 = vector.extract_strided_slice %8 {offsets = [1, 0, 0], sizes = [1, 8, 8], strides = [1, 1, 1]} : vector<4x8x8xf32> to vector<1x8x8xf32>
    %42 = vector.shape_cast %41 : vector<1x8x8xf32> to vector<8x8xf32>
    %43 = vector.broadcast %40 : f32 to vector<8x8xf32>
    %44 = arith.mulf %43, %42 : vector<8x8xf32>
    %45 = arith.addf %39, %44 : vector<8x8xf32>
    %c1_18 = arith.constant 1 : index
    %c2_19 = arith.constant 2 : index
    %46 = memref.load %arg4[%c1_18, %c2_19] : memref<8x4xf32, #tpu.memory_space<smem>>
    %47 = vector.extract_strided_slice %8 {offsets = [2, 0, 0], sizes = [1, 8, 8], strides = [1, 1, 1]} : vector<4x8x8xf32> to vector<1x8x8xf32>
    %48 = vector.shape_cast %47 : vector<1x8x8xf32> to vector<8x8xf32>
    %49 = vector.broadcast %46 : f32 to vector<8x8xf32>
    %50 = arith.mulf %49, %48 : vector<8x8xf32>
    %51 = arith.addf %45, %50 : vector<8x8xf32>
    %c1_20 = arith.constant 1 : index
    %c3_21 = arith.constant 3 : index
    %52 = memref.load %arg4[%c1_20, %c3_21] : memref<8x4xf32, #tpu.memory_space<smem>>
    %53 = vector.extract_strided_slice %8 {offsets = [3, 0, 0], sizes = [1, 8, 8], strides = [1, 1, 1]} : vector<4x8x8xf32> to vector<1x8x8xf32>
    %54 = vector.shape_cast %53 : vector<1x8x8xf32> to vector<8x8xf32>
    %55 = vector.broadcast %52 : f32 to vector<8x8xf32>
    %56 = arith.mulf %55, %54 : vector<8x8xf32>
    %57 = arith.addf %51, %56 : vector<8x8xf32>
    %c0_22 = arith.constant 0 : index
    %c1_23 = arith.constant 1 : index
    %c0_24 = arith.constant 0 : index
    %c0_25 = arith.constant 0 : index
    %58 = vector.load %arg5[%c0_22, %c1_23, %c0_24, %c0_25] : memref<1x8x8x8xf32, #tpu.memory_space<vmem>>, vector<1x1x8x8xf32>
    %59 = vector.shape_cast %58 : vector<1x1x8x8xf32> to vector<8x8xf32>
    %60 = vector.shape_cast %57 : vector<8x8xf32> to vector<1x1x8x8xf32>
    tpu.vector_store %arg5[%c0_22, %c1_23, %c0_24, %c0_25], %60 {strides = array<i32>} : memref<1x8x8x8xf32, #tpu.memory_space<vmem>>, vector<1x1x8x8xf32>,
    %c2_26 = arith.constant 2 : index
    %c0_27 = arith.constant 0 : index
    %61 = memref.load %arg4[%c2_26, %c0_27] : memref<8x4xf32, #tpu.memory_space<smem>>
    %62 = vector.extract_strided_slice %8 {offsets = [0, 0, 0], sizes = [1, 8, 8], strides = [1, 1, 1]} : vector<4x8x8xf32> to vector<1x8x8xf32>
    %63 = vector.shape_cast %62 : vector<1x8x8xf32> to vector<8x8xf32>
    %64 = vector.broadcast %61 : f32 to vector<8x8xf32>
    %65 = arith.mulf %64, %63 : vector<8x8xf32>
    %c2_28 = arith.constant 2 : index
    %c1_29 = arith.constant 1 : index
    %66 = memref.load %arg4[%c2_28, %c1_29] : memref<8x4xf32, #tpu.memory_space<smem>>
    %67 = vector.extract_strided_slice %8 {offsets = [1, 0, 0], sizes = [1, 8, 8], strides = [1, 1, 1]} : vector<4x8x8xf32> to vector<1x8x8xf32>
    %68 = vector.shape_cast %67 : vector<1x8x8xf32> to vector<8x8xf32>
    %69 = vector.broadcast %66 : f32 to vector<8x8xf32>
    %70 = arith.mulf %69, %68 : vector<8x8xf32>
    %71 = arith.addf %65, %70 : vector<8x8xf32>
    %c2_30 = arith.constant 2 : index
    %c2_31 = arith.constant 2 : index
    %72 = memref.load %arg4[%c2_30, %c2_31] : memref<8x4xf32, #tpu.memory_space<smem>>
    %73 = vector.extract_strided_slice %8 {offsets = [2, 0, 0], sizes = [1, 8, 8], strides = [1, 1, 1]} : vector<4x8x8xf32> to vector<1x8x8xf32>
    %74 = vector.shape_cast %73 : vector<1x8x8xf32> to vector<8x8xf32>
    %75 = vector.broadcast %72 : f32 to vector<8x8xf32>
    %76 = arith.mulf %75, %74 : vector<8x8xf32>
    %77 = arith.addf %71, %76 : vector<8x8xf32>
    %c2_32 = arith.constant 2 : index
    %c3_33 = arith.constant 3 : index
    %78 = memref.load %arg4[%c2_32, %c3_33] : memref<8x4xf32, #tpu.memory_space<smem>>
    %79 = vector.extract_strided_slice %8 {offsets = [3, 0, 0], sizes = [1, 8, 8], strides = [1, 1, 1]} : vector<4x8x8xf32> to vector<1x8x8xf32>
    %80 = vector.shape_cast %79 : vector<1x8x8xf32> to vector<8x8xf32>
    %81 = vector.broadcast %78 : f32 to vector<8x8xf32>
    %82 = arith.mulf %81, %80 : vector<8x8xf32>
    %83 = arith.addf %77, %82 : vector<8x8xf32>
    %c0_34 = arith.constant 0 : index
    %c2_35 = arith.constant 2 : index
    %c0_36 = arith.constant 0 : index
    %c0_37 = arith.constant 0 : index
    %84 = vector.load %arg5[%c0_34, %c2_35, %c0_36, %c0_37] : memref<1x8x8x8xf32, #tpu.memory_space<vmem>>, vector<1x1x8x8xf32>
    %85 = vector.shape_cast %84 : vector<1x1x8x8xf32> to vector<8x8xf32>
    %86 = vector.shape_cast %83 : vector<8x8xf32> to vector<1x1x8x8xf32>
    tpu.vector_store %arg5[%c0_34, %c2_35, %c0_36, %c0_37], %86 {strides = array<i32>} : memref<1x8x8x8xf32, #tpu.memory_space<vmem>>, vector<1x1x8x8xf32>,
    %c3_38 = arith.constant 3 : index
    %c0_39 = arith.constant 0 : index
    %87 = memref.load %arg4[%c3_38, %c0_39] : memref<8x4xf32, #tpu.memory_space<smem>>
    %88 = vector.extract_strided_slice %8 {offsets = [0, 0, 0], sizes = [1, 8, 8], strides = [1, 1, 1]} : vector<4x8x8xf32> to vector<1x8x8xf32>
    %89 = vector.shape_cast %88 : vector<1x8x8xf32> to vector<8x8xf32>
    %90 = vector.broadcast %87 : f32 to vector<8x8xf32>
    %91 = arith.mulf %90, %89 : vector<8x8xf32>
    %c3_40 = arith.constant 3 : index
    %c1_41 = arith.constant 1 : index
    %92 = memref.load %arg4[%c3_40, %c1_41] : memref<8x4xf32, #tpu.memory_space<smem>>
    %93 = vector.extract_strided_slice %8 {offsets = [1, 0, 0], sizes = [1, 8, 8], strides = [1, 1, 1]} : vector<4x8x8xf32> to vector<1x8x8xf32>
    %94 = vector.shape_cast %93 : vector<1x8x8xf32> to vector<8x8xf32>
    %95 = vector.broadcast %92 : f32 to vector<8x8xf32>
    %96 = arith.mulf %95, %94 : vector<8x8xf32>
    %97 = arith.addf %91, %96 : vector<8x8xf32>
    %c3_42 = arith.constant 3 : index
    %c2_43 = arith.constant 2 : index
    %98 = memref.load %arg4[%c3_42, %c2_43] : memref<8x4xf32, #tpu.memory_space<smem>>
    %99 = vector.extract_strided_slice %8 {offsets = [2, 0, 0], sizes = [1, 8, 8], strides = [1, 1, 1]} : vector<4x8x8xf32> to vector<1x8x8xf32>
    %100 = vector.shape_cast %99 : vector<1x8x8xf32> to vector<8x8xf32>
    %101 = vector.broadcast %98 : f32 to vector<8x8xf32>
    %102 = arith.mulf %101, %100 : vector<8x8xf32>
    %103 = arith.addf %97, %102 : vector<8x8xf32>
    %c3_44 = arith.constant 3 : index
    %c3_45 = arith.constant 3 : index
    %104 = memref.load %arg4[%c3_44, %c3_45] : memref<8x4xf32, #tpu.memory_space<smem>>
    %105 = vector.extract_strided_slice %8 {offsets = [3, 0, 0], sizes = [1, 8, 8], strides = [1, 1, 1]} : vector<4x8x8xf32> to vector<1x8x8xf32>
    %106 = vector.shape_cast %105 : vector<1x8x8xf32> to vector<8x8xf32>
    %107 = vector.broadcast %104 : f32 to vector<8x8xf32>
    %108 = arith.mulf %107, %106 : vector<8x8xf32>
    %109 = arith.addf %103, %108 : vector<8x8xf32>
    %c0_46 = arith.constant 0 : index
    %c3_47 = arith.constant 3 : index
    %c0_48 = arith.constant 0 : index
    %c0_49 = arith.constant 0 : index
    %110 = vector.load %arg5[%c0_46, %c3_47, %c0_48, %c0_49] : memref<1x8x8x8xf32, #tpu.memory_space<vmem>>, vector<1x1x8x8xf32>
    %111 = vector.shape_cast %110 : vector<1x1x8x8xf32> to vector<8x8xf32>
    %112 = vector.shape_cast %109 : vector<8x8xf32> to vector<1x1x8x8xf32>
    tpu.vector_store %arg5[%c0_46, %c3_47, %c0_48, %c0_49], %112 {strides = array<i32>} : memref<1x8x8x8xf32, #tpu.memory_space<vmem>>, vector<1x1x8x8xf32>,
    %c4 = arith.constant 4 : index
    %c0_50 = arith.constant 0 : index
    %113 = memref.load %arg4[%c4, %c0_50] : memref<8x4xf32, #tpu.memory_space<smem>>
    %114 = vector.extract_strided_slice %8 {offsets = [0, 0, 0], sizes = [1, 8, 8], strides = [1, 1, 1]} : vector<4x8x8xf32> to vector<1x8x8xf32>
    %115 = vector.shape_cast %114 : vector<1x8x8xf32> to vector<8x8xf32>
    %116 = vector.broadcast %113 : f32 to vector<8x8xf32>
    %117 = arith.mulf %116, %115 : vector<8x8xf32>
    %c4_51 = arith.constant 4 : index
    %c1_52 = arith.constant 1 : index
    %118 = memref.load %arg4[%c4_51, %c1_52] : memref<8x4xf32, #tpu.memory_space<smem>>
    %119 = vector.extract_strided_slice %8 {offsets = [1, 0, 0], sizes = [1, 8, 8], strides = [1, 1, 1]} : vector<4x8x8xf32> to vector<1x8x8xf32>
    %120 = vector.shape_cast %119 : vector<1x8x8xf32> to vector<8x8xf32>
    %121 = vector.broadcast %118 : f32 to vector<8x8xf32>
    %122 = arith.mulf %121, %120 : vector<8x8xf32>
    %123 = arith.addf %117, %122 : vector<8x8xf32>
    %c4_53 = arith.constant 4 : index
    %c2_54 = arith.constant 2 : index
    %124 = memref.load %arg4[%c4_53, %c2_54] : memref<8x4xf32, #tpu.memory_space<smem>>
    %125 = vector.extract_strided_slice %8 {offsets = [2, 0, 0], sizes = [1, 8, 8], strides = [1, 1, 1]} : vector<4x8x8xf32> to vector<1x8x8xf32>
    %126 = vector.shape_cast %125 : vector<1x8x8xf32> to vector<8x8xf32>
    %127 = vector.broadcast %124 : f32 to vector<8x8xf32>
    %128 = arith.mulf %127, %126 : vector<8x8xf32>
    %129 = arith.addf %123, %128 : vector<8x8xf32>
    %c4_55 = arith.constant 4 : index
    %c3_56 = arith.constant 3 : index
    %130 = memref.load %arg4[%c4_55, %c3_56] : memref<8x4xf32, #tpu.memory_space<smem>>
    %131 = vector.extract_strided_slice %8 {offsets = [3, 0, 0], sizes = [1, 8, 8], strides = [1, 1, 1]} : vector<4x8x8xf32> to vector<1x8x8xf32>
    %132 = vector.shape_cast %131 : vector<1x8x8xf32> to vector<8x8xf32>
    %133 = vector.broadcast %130 : f32 to vector<8x8xf32>
    %134 = arith.mulf %133, %132 : vector<8x8xf32>
    %135 = arith.addf %129, %134 : vector<8x8xf32>
    %c0_57 = arith.constant 0 : index
    %c4_58 = arith.constant 4 : index
    %c0_59 = arith.constant 0 : index
    %c0_60 = arith.constant 0 : index
    %136 = vector.load %arg5[%c0_57, %c4_58, %c0_59, %c0_60] : memref<1x8x8x8xf32, #tpu.memory_space<vmem>>, vector<1x1x8x8xf32>
    %137 = vector.shape_cast %136 : vector<1x1x8x8xf32> to vector<8x8xf32>
    %138 = vector.shape_cast %135 : vector<8x8xf32> to vector<1x1x8x8xf32>
    tpu.vector_store %arg5[%c0_57, %c4_58, %c0_59, %c0_60], %138 {strides = array<i32>} : memref<1x8x8x8xf32, #tpu.memory_space<vmem>>, vector<1x1x8x8xf32>,
    %c5 = arith.constant 5 : index
    %c0_61 = arith.constant 0 : index
    %139 = memref.load %arg4[%c5, %c0_61] : memref<8x4xf32, #tpu.memory_space<smem>>
    %140 = vector.extract_strided_slice %8 {offsets = [0, 0, 0], sizes = [1, 8, 8], strides = [1, 1, 1]} : vector<4x8x8xf32> to vector<1x8x8xf32>
    %141 = vector.shape_cast %140 : vector<1x8x8xf32> to vector<8x8xf32>
    %142 = vector.broadcast %139 : f32 to vector<8x8xf32>
    %143 = arith.mulf %142, %141 : vector<8x8xf32>
    %c5_62 = arith.constant 5 : index
    %c1_63 = arith.constant 1 : index
    %144 = memref.load %arg4[%c5_62, %c1_63] : memref<8x4xf32, #tpu.memory_space<smem>>
    %145 = vector.extract_strided_slice %8 {offsets = [1, 0, 0], sizes = [1, 8, 8], strides = [1, 1, 1]} : vector<4x8x8xf32> to vector<1x8x8xf32>
    %146 = vector.shape_cast %145 : vector<1x8x8xf32> to vector<8x8xf32>
    %147 = vector.broadcast %144 : f32 to vector<8x8xf32>
    %148 = arith.mulf %147, %146 : vector<8x8xf32>
    %149 = arith.addf %143, %148 : vector<8x8xf32>
    %c5_64 = arith.constant 5 : index
    %c2_65 = arith.constant 2 : index
    %150 = memref.load %arg4[%c5_64, %c2_65] : memref<8x4xf32, #tpu.memory_space<smem>>
    %151 = vector.extract_strided_slice %8 {offsets = [2, 0, 0], sizes = [1, 8, 8], strides = [1, 1, 1]} : vector<4x8x8xf32> to vector<1x8x8xf32>
    %152 = vector.shape_cast %151 : vector<1x8x8xf32> to vector<8x8xf32>
    %153 = vector.broadcast %150 : f32 to vector<8x8xf32>
    %154 = arith.mulf %153, %152 : vector<8x8xf32>
    %155 = arith.addf %149, %154 : vector<8x8xf32>
    %c5_66 = arith.constant 5 : index
    %c3_67 = arith.constant 3 : index
    %156 = memref.load %arg4[%c5_66, %c3_67] : memref<8x4xf32, #tpu.memory_space<smem>>
    %157 = vector.extract_strided_slice %8 {offsets = [3, 0, 0], sizes = [1, 8, 8], strides = [1, 1, 1]} : vector<4x8x8xf32> to vector<1x8x8xf32>
    %158 = vector.shape_cast %157 : vector<1x8x8xf32> to vector<8x8xf32>
    %159 = vector.broadcast %156 : f32 to vector<8x8xf32>
    %160 = arith.mulf %159, %158 : vector<8x8xf32>
    %161 = arith.addf %155, %160 : vector<8x8xf32>
    %c0_68 = arith.constant 0 : index
    %c5_69 = arith.constant 5 : index
    %c0_70 = arith.constant 0 : index
    %c0_71 = arith.constant 0 : index
    %162 = vector.load %arg5[%c0_68, %c5_69, %c0_70, %c0_71] : memref<1x8x8x8xf32, #tpu.memory_space<vmem>>, vector<1x1x8x8xf32>
    %163 = vector.shape_cast %162 : vector<1x1x8x8xf32> to vector<8x8xf32>
    %164 = vector.shape_cast %161 : vector<8x8xf32> to vector<1x1x8x8xf32>
    tpu.vector_store %arg5[%c0_68, %c5_69, %c0_70, %c0_71], %164 {strides = array<i32>} : memref<1x8x8x8xf32, #tpu.memory_space<vmem>>, vector<1x1x8x8xf32>,
    %c6 = arith.constant 6 : index
    %c0_72 = arith.constant 0 : index
    %165 = memref.load %arg4[%c6, %c0_72] : memref<8x4xf32, #tpu.memory_space<smem>>
    %166 = vector.extract_strided_slice %8 {offsets = [0, 0, 0], sizes = [1, 8, 8], strides = [1, 1, 1]} : vector<4x8x8xf32> to vector<1x8x8xf32>
    %167 = vector.shape_cast %166 : vector<1x8x8xf32> to vector<8x8xf32>
    %168 = vector.broadcast %165 : f32 to vector<8x8xf32>
    %169 = arith.mulf %168, %167 : vector<8x8xf32>
    %c6_73 = arith.constant 6 : index
    %c1_74 = arith.constant 1 : index
    %170 = memref.load %arg4[%c6_73, %c1_74] : memref<8x4xf32, #tpu.memory_space<smem>>
    %171 = vector.extract_strided_slice %8 {offsets = [1, 0, 0], sizes = [1, 8, 8], strides = [1, 1, 1]} : vector<4x8x8xf32> to vector<1x8x8xf32>
    %172 = vector.shape_cast %171 : vector<1x8x8xf32> to vector<8x8xf32>
    %173 = vector.broadcast %170 : f32 to vector<8x8xf32>
    %174 = arith.mulf %173, %172 : vector<8x8xf32>
    %175 = arith.addf %169, %174 : vector<8x8xf32>
    %c6_75 = arith.constant 6 : index
    %c2_76 = arith.constant 2 : index
    %176 = memref.load %arg4[%c6_75, %c2_76] : memref<8x4xf32, #tpu.memory_space<smem>>
    %177 = vector.extract_strided_slice %8 {offsets = [2, 0, 0], sizes = [1, 8, 8], strides = [1, 1, 1]} : vector<4x8x8xf32> to vector<1x8x8xf32>
    %178 = vector.shape_cast %177 : vector<1x8x8xf32> to vector<8x8xf32>
    %179 = vector.broadcast %176 : f32 to vector<8x8xf32>
    %180 = arith.mulf %179, %178 : vector<8x8xf32>
    %181 = arith.addf %175, %180 : vector<8x8xf32>
    %c6_77 = arith.constant 6 : index
    %c3_78 = arith.constant 3 : index
    %182 = memref.load %arg4[%c6_77, %c3_78] : memref<8x4xf32, #tpu.memory_space<smem>>
    %183 = vector.extract_strided_slice %8 {offsets = [3, 0, 0], sizes = [1, 8, 8], strides = [1, 1, 1]} : vector<4x8x8xf32> to vector<1x8x8xf32>
    %184 = vector.shape_cast %183 : vector<1x8x8xf32> to vector<8x8xf32>
    %185 = vector.broadcast %182 : f32 to vector<8x8xf32>
    %186 = arith.mulf %185, %184 : vector<8x8xf32>
    %187 = arith.addf %181, %186 : vector<8x8xf32>
    %c0_79 = arith.constant 0 : index
    %c6_80 = arith.constant 6 : index
    %c0_81 = arith.constant 0 : index
    %c0_82 = arith.constant 0 : index
    %188 = vector.load %arg5[%c0_79, %c6_80, %c0_81, %c0_82] : memref<1x8x8x8xf32, #tpu.memory_space<vmem>>, vector<1x1x8x8xf32>
    %189 = vector.shape_cast %188 : vector<1x1x8x8xf32> to vector<8x8xf32>
    %190 = vector.shape_cast %187 : vector<8x8xf32> to vector<1x1x8x8xf32>
    tpu.vector_store %arg5[%c0_79, %c6_80, %c0_81, %c0_82], %190 {strides = array<i32>} : memref<1x8x8x8xf32, #tpu.memory_space<vmem>>, vector<1x1x8x8xf32>,
    %c7 = arith.constant 7 : index
    %c0_83 = arith.constant 0 : index
    %191 = memref.load %arg4[%c7, %c0_83] : memref<8x4xf32, #tpu.memory_space<smem>>
    %192 = vector.extract_strided_slice %8 {offsets = [0, 0, 0], sizes = [1, 8, 8], strides = [1, 1, 1]} : vector<4x8x8xf32> to vector<1x8x8xf32>
    %193 = vector.shape_cast %192 : vector<1x8x8xf32> to vector<8x8xf32>
    %194 = vector.broadcast %191 : f32 to vector<8x8xf32>
    %195 = arith.mulf %194, %193 : vector<8x8xf32>
    %c7_84 = arith.constant 7 : index
    %c1_85 = arith.constant 1 : index
    %196 = memref.load %arg4[%c7_84, %c1_85] : memref<8x4xf32, #tpu.memory_space<smem>>
    %197 = vector.extract_strided_slice %8 {offsets = [1, 0, 0], sizes = [1, 8, 8], strides = [1, 1, 1]} : vector<4x8x8xf32> to vector<1x8x8xf32>
    %198 = vector.shape_cast %197 : vector<1x8x8xf32> to vector<8x8xf32>
    %199 = vector.broadcast %196 : f32 to vector<8x8xf32>
    %200 = arith.mulf %199, %198 : vector<8x8xf32>
    %201 = arith.addf %195, %200 : vector<8x8xf32>
    %c7_86 = arith.constant 7 : index
    %c2_87 = arith.constant 2 : index
    %202 = memref.load %arg4[%c7_86, %c2_87] : memref<8x4xf32, #tpu.memory_space<smem>>
    %203 = vector.extract_strided_slice %8 {offsets = [2, 0, 0], sizes = [1, 8, 8], strides = [1, 1, 1]} : vector<4x8x8xf32> to vector<1x8x8xf32>
    %204 = vector.shape_cast %203 : vector<1x8x8xf32> to vector<8x8xf32>
    %205 = vector.broadcast %202 : f32 to vector<8x8xf32>
    %206 = arith.mulf %205, %204 : vector<8x8xf32>
    %207 = arith.addf %201, %206 : vector<8x8xf32>
    %c7_88 = arith.constant 7 : index
    %c3_89 = arith.constant 3 : index
    %208 = memref.load %arg4[%c7_88, %c3_89] : memref<8x4xf32, #tpu.memory_space<smem>>
    %209 = vector.extract_strided_slice %8 {offsets = [3, 0, 0], sizes = [1, 8, 8], strides = [1, 1, 1]} : vector<4x8x8xf32> to vector<1x8x8xf32>
    %210 = vector.shape_cast %209 : vector<1x8x8xf32> to vector<8x8xf32>
    %211 = vector.broadcast %208 : f32 to vector<8x8xf32>
    %212 = arith.mulf %211, %210 : vector<8x8xf32>
    %213 = arith.addf %207, %212 : vector<8x8xf32>
    %c0_90 = arith.constant 0 : index
    %c7_91 = arith.constant 7 : index
    %c0_92 = arith.constant 0 : index
    %c0_93 = arith.constant 0 : index
    %214 = vector.load %arg5[%c0_90, %c7_91, %c0_92, %c0_93] : memref<1x8x8x8xf32, #tpu.memory_space<vmem>>, vector<1x1x8x8xf32>
    %215 = vector.shape_cast %214 : vector<1x1x8x8xf32> to vector<8x8xf32>
    %216 = vector.shape_cast %213 : vector<8x8xf32> to vector<1x1x8x8xf32>
    tpu.vector_store %arg5[%c0_90, %c7_91, %c0_92, %c0_93], %216 {strides = array<i32>} : memref<1x8x8x8xf32, #tpu.memory_space<vmem>>, vector<1x1x8x8xf32>,
    return
  }
  func.func @transform_0(%arg0: i32, %arg1: i32) -> (i32, i32, i32, i32) {
    %c0_i32 = arith.constant 0 : i32
    %c0_i32_0 = arith.constant 0 : i32
    %c0_i32_1 = arith.constant 0 : i32
    return %arg0, %c0_i32, %arg1, %c0_i32_0 : i32, i32, i32, i32
  }
  func.func @transform_1(%arg0: i32, %arg1: i32) -> (i32, i32) {
    %c0_i32 = arith.constant 0 : i32
    %c0_i32_0 = arith.constant 0 : i32
    %c0_i32_1 = arith.constant 0 : i32
    return %c0_i32, %c0_i32_0 : i32, i32
  }
  func.func @transform_2(%arg0: i32, %arg1: i32) -> (i32, i32) {
    %c0_i32 = arith.constant 0 : i32
    %c0_i32_0 = arith.constant 0 : i32
    %c0_i32_1 = arith.constant 0 : i32
    return %c0_i32, %c0_i32_0 : i32, i32
  }
  func.func @transform_3(%arg0: i32, %arg1: i32) -> (i32, i32, i32, i32) {
    %c0_i32 = arith.constant 0 : i32
    %c0_i32_0 = arith.constant 0 : i32
    %c0_i32_1 = arith.constant 0 : i32
    return %arg0, %c0_i32, %arg1, %c0_i32_0 : i32, i32, i32, i32
  }
}

</mosaic_0001>

<llo_original>
// kernel: tpu_custom_call.1
$region0: #{tpu_custom_call.1}
  #allocation0 [shape = 'u32[]', space=smem, size = 0x4, offset = 0x4, fixed_abs, tag = 'smem constant byte address 0x4 - core index']
  #allocation1 [shape = 'u32[144,128]{1,0:T(1,128)}', space=vmem, size = 0x12000, scoped, tag = 'internal scratch']
  %s0 = inlined_call_operand.hbm [shape: f32[2,4,8,32], index: 0, kind: input, shape index: {}]
  %s1 = inlined_call_operand.vmem [shape: f32[16,8], index: 1, kind: input, shape index: {}]
  %s2 = inlined_call_operand.vmem [shape: f32[8,4], index: 2, kind: input, shape index: {}]
  %s3 = inlined_call_operand.hbm [shape: f32[2,8,8,8], index: 3, kind: output, shape index: {}]
  %s4 = sld [smem:[#allocation0]]
  $region53: #{tpu_custom_call.1} parent=0
    _
  %s6 = ssub.s32 1, %s4
  %s7 = scalar_select 0, %s6, %s4
  $region1: #{tpu_custom_call.1} parent=0
    #allocation2 [shape = 'u8[32768]{0}', space=vmem, size = 0x8000, scoped, tag = 'input window, operand 0']
    #allocation3 [shape = 's32[2]{0}', space=sflag, size = 0x8, scoped, tag = 'scoped memory for tpu_custom_call.1']
    #allocation4 [shape = 's32[2]{0}', space=sflag, size = 0x8, scoped, tag = 'scoped memory for tpu_custom_call.1']
    #allocation5 [shape = 's32[2]{0}', space=sflag, size = 0x8, scoped, tag = 'scoped memory for tpu_custom_call.1']
    #allocation6 [shape = 'u8[4096]{0}', space=smem, size = 0x1000, scoped, tag = 'input window, operand 2, single buffered']
    #allocation7 [shape = 'u8[65536]{0}', space=vmem, size = 0x10000, scoped, tag = 'output window, operand 0']
    %8 = vsyncpa [#allocation3], 0
    %s9 = scalar_lea.sflag [#allocation3], 1
    %10 = vsyncpa %s9, 0
    %11 = vsyncpa [#allocation5], 0
    %12 = vsyncpa [#allocation4], 0
    %s13 = scalar_lea.sflag [#allocation4], 1
    %14 = vsyncpa %s13, 0
    loop: start=0, step=1, limit=4
    $region2: #{tpu_custom_call.1} parent=1 // loop_pre_header
      _
    $region3: #{tpu_custom_call.1} parent=1 // loop_header
      %s16 = sphi 0, %s20
      %p17 = scmp.ge.s32.totalorder %s16, 4
      %s23 = sphi 0, %s35
      %s24 = sphi 0, %s31
      %s25 = sphi 0, %s23
      %s26 = sphi 0, %s24
      %s27 = sphi 0, %s25
      %s28 = sphi 0, %s26
      %s40 = sphi 0, %s42
      %s43 = sphi 0, %s40
      %s44 = sphi 0, %s43
      %s60 = sphi 0, %s44
      %s64 = sphi 0, %s64
      %s66 = sphi 0, %s64
      %s67 = sphi 0, %s66
      %s81 = sphi 0, %s67
      %s85 = sphi 0, %s85
      %s87 = sphi 0, %s85
      %s88 = sphi 0, %s87
      %s102 = sphi 0, %s88
      %s110 = sphi 0, %s112
      %s113 = sphi 0, %s110
      %s114 = sphi 0, %s113
      %s130 = sphi 0, %s114
    $region4: #{tpu_custom_call.1} parent=1 // loop_header_branch
      %19 = sbr.rel (%p17) target = $region8
    $region5: #{tpu_custom_call.1} parent=1 // loop_body
      %s21 = ssub.s32 %s16, 1
      %s22 = ssub.s32 %s16, 2
      %s29 = sadd.s32 1, %s24
      %p30 = scmp.ge.s32.totalorder %s29, 1
      %s31 = scalar_select %p30, 0, %s29
      %s32 = sadd.s32 1, %s23
      %s33 = scalar_select %p30, %s32, %s23
      %p34 = scmp.ge.s32.totalorder %s33, 2
      %s35 = scalar_select %p34, 0, %s33
      %s36 = ssub.s32 %s23, %s35
      %s37 = ssub.s32 %s24, %s31
      %s38 = sor.u32 %s36, %s37
      %p39 = scmp.eq.s32.totalorder %s38, 0
      %s41 = sadd.s32 %s40, 1
      %s42 = scalar_select %p39, %s40, %s41
      %p45 = pneg %p39
      %p46 = scmp.eq.s32.totalorder %s16, 1
      %p47 = por %p45, %p46
      %p48 = scmp.ne.s32.totalorder %s40, %s43
      %p49 = scmp.eq.s32.totalorder %s16, 0
      %p50 = por %p48, %p49
      %p51 = scmp.ne.s32.totalorder %s40, %s43
      %p52 = scmp.eq.s32.totalorder %s21, 1
      %p53 = por %p51, %p52
      %p54 = scmp.ne.s32.totalorder %s43, %s44
      %p55 = scmp.eq.s32.totalorder %s21, 0
      %p56 = por %p54, %p55
      %p57 = scmp.ne.s32.totalorder %s43, %s44
      %p58 = scmp.eq.s32.totalorder %s22, 1
      %p59 = por %p57, %p58
      %p61 = scmp.ne.s32.totalorder %s44, %s60
      %p62 = scmp.eq.s32.totalorder %s22, 0
      %p63 = por %p61, %p62
      %s65 = sadd.s32 %s64, 1
      %p68 = scmp.eq.s32.totalorder %s16, 1
      %p69 = scmp.ne.s32.totalorder %s64, %s66
      %p70 = scmp.eq.s32.totalorder %s16, 0
      %p71 = por %p69, %p70
      %p72 = scmp.ne.s32.totalorder %s64, %s66
      %p73 = scmp.eq.s32.totalorder %s21, 1
      %p74 = por %p72, %p73
      %p75 = scmp.ne.s32.totalorder %s66, %s67
      %p76 = scmp.eq.s32.totalorder %s21, 0
      %p77 = por %p75, %p76
      %p78 = scmp.ne.s32.totalorder %s66, %s67
      %p79 = scmp.eq.s32.totalorder %s22, 1
      %p80 = por %p78, %p79
      %p82 = scmp.ne.s32.totalorder %s67, %s81
      %p83 = scmp.eq.s32.totalorder %s22, 0
      %p84 = por %p82, %p83
      %s86 = sadd.s32 %s85, 1
      %p89 = scmp.eq.s32.totalorder %s16, 1
      %p90 = scmp.ne.s32.totalorder %s85, %s87
      %p91 = scmp.eq.s32.totalorder %s16, 0
      %p92 = por %p90, %p91
      %p93 = scmp.ne.s32.totalorder %s85, %s87
      %p94 = scmp.eq.s32.totalorder %s21, 1
      %p95 = por %p93, %p94
      %p96 = scmp.ne.s32.totalorder %s87, %s88
      %p97 = scmp.eq.s32.totalorder %s21, 0
      %p98 = por %p96, %p97
      %p99 = scmp.ne.s32.totalorder %s87, %s88
      %p100 = scmp.eq.s32.totalorder %s22, 1
      %p101 = por %p99, %p100
      %p103 = scmp.ne.s32.totalorder %s88, %s102
      %p104 = scmp.eq.s32.totalorder %s22, 0
      %p105 = por %p103, %p104
      %s106 = ssub.s32 %s23, %s35
      %s107 = ssub.s32 %s24, %s31
      %s108 = sor.u32 %s106, %s107
      %p109 = scmp.eq.s32.totalorder %s108, 0
      %s111 = sadd.s32 %s110, 1
      %s112 = scalar_select %p109, %s110, %s111
      %p115 = pneg %p109
      %p116 = scmp.eq.s32.totalorder %s16, 1
      %p117 = por %p115, %p116
      %p118 = scmp.ne.s32.totalorder %s110, %s113
      %p119 = scmp.eq.s32.totalorder %s16, 0
      %p120 = por %p118, %p119
      %p121 = scmp.ne.s32.totalorder %s110, %s113
      %p122 = scmp.eq.s32.totalorder %s21, 1
      %p123 = por %p121, %p122
      %p124 = scmp.ne.s32.totalorder %s113, %s114
      %p125 = scmp.eq.s32.totalorder %s21, 0
      %p126 = por %p124, %p125
      %p127 = scmp.ne.s32.totalorder %s113, %s114
      %p128 = scmp.eq.s32.totalorder %s22, 1
      %p129 = por %p127, %p128
      %p131 = scmp.ne.s32.totalorder %s114, %s130
      %p132 = scmp.eq.s32.totalorder %s22, 0
      %p133 = por %p131, %p132
      %p134 = scmp.le.s32.totalorder 1, %s16
      %p135 = scmp.lt.s32.totalorder %s16, 3
      %p136 = pnand %p134, %p135
      %p137 = pneg %p136
      // Predicated region
      $region9: #{tpu_custom_call.1} parent=5 // pred_check
        _
      $region10: #{tpu_custom_call.1} parent=5 // pred_check_branch
        %139 = sbr.rel (%p136) target = $region12
      $region11: #{tpu_custom_call.1} parent=5 // pred_region
        %s140 = ssub.s32 %s16, 1
        // Predicated region
        $region13: #{tpu_custom_call.1} parent=11 // pred_check
          %p141 = pneg %p77
        $region14: #{tpu_custom_call.1} parent=11 // pred_check_branch
          %143 = sbr.rel (%p141) target = $region16
        $region15: #{tpu_custom_call.1} parent=11 // pred_region
          _
        $region16: #{tpu_custom_call.1} parent=11 // pred_fallthru
          _
        // Predicated region
        $region17: #{tpu_custom_call.1} parent=11 // pred_check
          %p144 = pneg %p98
        $region18: #{tpu_custom_call.1} parent=11 // pred_check_branch
          %146 = sbr.rel (%p144) target = $region20
        $region19: #{tpu_custom_call.1} parent=11 // pred_region
          %s148 = ssub.s32 128, 128
          %149 = vsyncadd [#allocation5], %s148
          %s151 = sshll.u32 %s2, 4
          %s152 = int_to_ptr.vmem [resolvable:$true] %s151
          %154 = dma.vmem_to_smem %s152, 128, [#allocation6], [#allocation5]
        $region20: #{tpu_custom_call.1} parent=11 // pred_fallthru
          _
      $region12: #{tpu_custom_call.1} parent=5 // pred_fallthru
        _
      %p155 = scmp.lt.s32.totalorder %s16, 2
      // Predicated region
      $region21: #{tpu_custom_call.1} parent=5 // pred_check
        %p156 = pneg %p155
      $region22: #{tpu_custom_call.1} parent=5 // pred_check_branch
        %158 = sbr.rel (%p156) target = $region24
      $region23: #{tpu_custom_call.1} parent=5 // pred_region
        // Predicated region
        $region25: #{tpu_custom_call.1} parent=23 // pred_check
          %p159 = pneg %p50
        $region26: #{tpu_custom_call.1} parent=23 // pred_check_branch
          %161 = sbr.rel (%p159) target = $region28
        $region27: #{tpu_custom_call.1} parent=23 // pred_region
          %s162 = sand.u32 %s40, 1
          %s163 = scalar_lea.sflag [#allocation3], %s162
          %s164 = sand.u32 %s40, 1
          %s165 = smul.addr %s164, 32
          %s166 = scalar_lea.vmem [#allocation2], %s165
          %s168 = ssub.s32 512, 512
          %169 = vsyncadd %s163, %s168
          %s170 = smul.addr %s23, 4
          %s171 = sadd.s32 %s24, %s170
          %s172 = smul.addr %s171, 128
          %s173 = scalar_lea.hbm %s0, %s172
          %s174 = sshll.u32 %s166, 4
          %s175 = int_to_ptr.vmem [resolvable:$true] %s174
          %180 = dma.hbm_to_vmem [thread:$0]  %s173, 512, %s175, %s163, 128, 128, 8
        $region28: #{tpu_custom_call.1} parent=23 // pred_fallthru
          _
      $region24: #{tpu_custom_call.1} parent=5 // pred_fallthru
        _
      %p181 = scmp.le.s32.totalorder 1, %s16
      %p182 = scmp.lt.s32.totalorder %s16, 3
      %p183 = pnand %p181, %p182
      %p184 = pneg %p183
      // Predicated region
      $region29: #{tpu_custom_call.1} parent=5 // pred_check
        _
      $region30: #{tpu_custom_call.1} parent=5 // pred_check_branch
        %186 = sbr.rel (%p183) target = $region32
      $region31: #{tpu_custom_call.1} parent=5 // pred_region
        %s187 = ssub.s32 %s16, 1
        %s188 = sand.u32 %s43, 1
        %s189 = scalar_lea.sflag [#allocation3], %s188
        %s190 = sand.u32 %s43, 1
        %s191 = smul.addr %s190, 32
        %s192 = scalar_lea.vmem [#allocation2], %s191
        // Predicated region
        $region33: #{tpu_custom_call.1} parent=31 // pred_check
          %p193 = pneg %p56
        $region34: #{tpu_custom_call.1} parent=31 // pred_check_branch
          %195 = sbr.rel (%p193) target = $region36
        $region35: #{tpu_custom_call.1} parent=31 // pred_region
          %196 = dma.done %s189, 512
        $region36: #{tpu_custom_call.1} parent=31 // pred_fallthru
          _
        // Predicated region
        $region37: #{tpu_custom_call.1} parent=31 // pred_check
          %p197 = pneg %p98
        $region38: #{tpu_custom_call.1} parent=31 // pred_check_branch
          %199 = sbr.rel (%p197) target = $region40
        $region39: #{tpu_custom_call.1} parent=31 // pred_region
          %200 = dma.done [#allocation5], 128
        $region40: #{tpu_custom_call.1} parent=31 // pred_fallthru
          _
        %201 = sfence
        %s202 = sand.u32 %s43, 1
        %s203 = scalar_lea.sflag [#allocation3], %s202
        %s204 = sand.u32 %s43, 1
        %s205 = smul.addr %s204, 32
        %s206 = scalar_lea.vmem [#allocation2], %s205
        %p207 = pneg %p56
        %p208 = pneg %p53
        %p209 = pneg %p77
        %p210 = pneg %p74
        %p211 = pneg %p98
        %p212 = pneg %p95
        %p213 = pneg %p126
        %p214 = pneg %p123
        %s215 = sand.u32 %s113, 1
        %s216 = scalar_lea.sflag [#allocation4], %s215
        %s217 = sand.u32 %s113, 1
        %s218 = smul.addr %s217, 64
        %s219 = scalar_lea.vmem [#allocation7], %s218
        %v220 = vld [vmem:[%s192] sm:$0xff]
        %v221 = vld [vmem:[%s192 + $0x8] sm:$0xff]
        %v222 = vld [vmem:[%s192 + $0x10] sm:$0xff]
        %v223 = vld [vmem:[%s192 + $0x18] sm:$0xff]
        %228 = vrot.lane.b32.xlu0 %v220, 112
        %v229 = vpop.permute.xlu0 %228
        %230 = vrot.lane.b32.xlu0 %v221, 112
        %v231 = vpop.permute.xlu0 %230
        %232 = vrot.lane.b32.xlu0 %v222, 112
        %v233 = vpop.permute.xlu0 %232
        %234 = vrot.lane.b32.xlu0 %v223, 112
        %v235 = vpop.permute.xlu0 %234
        %v240 = vadd.f32 %v220, %v229
        %v241 = vadd.f32 %v221, %v231
        %v242 = vadd.f32 %v222, %v233
        %v243 = vadd.f32 %v223, %v235
        %v244 = vld [vmem:[%s1] sm:$0xff]
        %v245 = vld [vmem:[%s1 + $0x8] sm:$0xff]
        %vm246 = vcmask 130048
        %v248 = vsel %vm246, %v240, 0
        %v251 = vsel %vm246, %v241, 0
        %v254 = vsel %vm246, %v242, 0
        %v257 = vsel %vm246, %v243, 0
        %259 = vmatprep.subr.mxu0 0.0
        %260 = vmatpush1.msra.mxu0 %v244
        %261 = vmatprep.subr.mxu0 0.0
        %262 = vmatpush1.msra.mxu0 %v245
        %263 = vmatprep.subr.mxu0 0.0
        %264 = vmatpush1.msra.mxu0 0.0
        %265 = vmatprep.subr.mxu0 0.0
        %266 = vmatpush1.msra.mxu0 0.0
        %267 = vmatprep.subr.mxu0 0.0
        %268 = vmatpush1.msra.mxu0 0.0
        %269 = vmatprep.subr.mxu0 0.0
        %270 = vmatpush1.msra.mxu0 0.0
        %271 = vmatprep.subr.mxu0 0.0
        %272 = vmatpush1.msra.mxu0 0.0
        %273 = vmatprep.subr.mxu0 0.0
        %274 = vmatpush1.msra.mxu0 0.0
        %275 = vmatprep.subr.mxu0 0.0
        %276 = vmatpush1.msra.mxu0 0.0
        %277 = vmatprep.subr.mxu0 0.0
        %278 = vmatpush1.msra.mxu0 0.0
        %279 = vmatprep.subr.mxu0 0.0
        %280 = vmatpush1.msra.mxu0 0.0
        %281 = vmatprep.subr.mxu0 0.0
        %282 = vmatpush1.msra.mxu0 0.0
        %283 = vmatprep.subr.mxu0 0.0
        %284 = vmatpush1.msra.mxu0 0.0
        %285 = vmatprep.subr.mxu0 0.0
        %286 = vmatpush1.msra.mxu0 0.0
        %287 = vmatprep.subr.mxu0 0.0
        %288 = vmatpush1.msra.mxu0 0.0
        %289 = vmatprep.subr.mxu0 0.0
        %290 = vmatpush1.msra.mxu0 0.0
        %291 = vmatprep.subr.mxu0 0.0
        %292 = vmatpush1.msra.mxu0 0.0
        %293 = vmatprep.subr.mxu0 0.0
        %294 = vmatpush1.msra.mxu0 0.0
        %295 = vmatprep.subr.mxu0 0.0
        %296 = vmatpush1.msra.mxu0 0.0
        %297 = vmatprep.subr.mxu0 0.0
        %298 = vmatpush1.msra.mxu0 0.0
        %299 = vmatprep.subr.mxu0 0.0
        %300 = vmatpush1.msra.mxu0 0.0
        %301 = vmatprep.subr.mxu0 0.0
        %302 = vmatpush1.msra.mxu0 0.0
        %303 = vmatprep.subr.mxu0 0.0
        %304 = vmatpush1.msra.mxu0 0.0
        %305 = vmatprep.subr.mxu0 0.0
        %306 = vmatpush1.msra.mxu0 0.0
        %307 = vmatprep.subr.mxu0 0.0
        %308 = vmatpush1.msra.mxu0 0.0
        %309 = vmatprep.subr.mxu0 0.0
        %310 = vmatpush1.msra.mxu0 0.0
        %311 = vmatprep.subr.mxu0 0.0
        %312 = vmatpush1.msra.mxu0 0.0
        %313 = vmatprep.subr.mxu0 0.0
        %314 = vmatpush1.msra.mxu0 0.0
        %315 = vmatprep.subr.mxu0 0.0
        %316 = vmatpush1.msra.mxu0 0.0
        %317 = vmatprep.subr.mxu0 0.0
        %318 = vmatpush1.msra.mxu0 0.0
        %319 = vmatprep.subr.mxu0 0.0
        %320 = vmatpush1.msra.mxu0 0.0
        %321 = vmatprep.subr.mxu0 0.0
        %322 = vmatpush1.msra.mxu0 0.0
        %323 = vmatprep.mubr.f32.mxu0 0.0
        %324 = vmatmul.mubr.f32.gmra.mrb[0].mxu0 %v248
        %v325 = vpop.f32.mrb[0].mxu0
        %v326 = vadd.f32 0.0, %v325
        %v327 = vpop.f32.mrb[0].mxu0
        %328 = vmatprep.mubr.f32.mxu0 0.0
        %329 = vmatmul.mubr.f32.gmra.mrb[0].mxu0 %v251
        %v330 = vpop.f32.mrb[0].mxu0
        %v331 = vadd.f32 0.0, %v330
        %v332 = vpop.f32.mrb[0].mxu0
        %333 = vmatprep.mubr.f32.mxu0 0.0
        %334 = vmatmul.mubr.f32.gmra.mrb[0].mxu0 %v254
        %v335 = vpop.f32.mrb[0].mxu0
        %v336 = vadd.f32 0.0, %v335
        %v337 = vpop.f32.mrb[0].mxu0
        %338 = vmatprep.mubr.f32.mxu0 0.0
        %339 = vmatmul.mubr.f32.gmra.mrb[0].mxu0 %v257
        %v340 = vpop.f32.mrb[0].mxu0
        %v341 = vadd.f32 0.0, %v340
        %v342 = vpop.f32.mrb[0].mxu0
        %343 = vdwg.mxu0
        %s344 = sld [smem:[#allocation6]]
        %v345 = vstv %s344
        %v346 = vmul.f32 %v345, %v326
        %s347 = sld [smem:[#allocation6 + $0x1]]
        %v348 = vstv %s347
        %v349 = vmul.f32 %v348, %v331
        %v350 = vadd.f32 %v346, %v349
        %s351 = sld [smem:[#allocation6 + $0x2]]
        %v352 = vstv %s351
        %v353 = vmul.f32 %v352, %v336
        %v354 = vadd.f32 %v350, %v353
        %s355 = sld [smem:[#allocation6 + $0x3]]
        %v356 = vstv %s355
        %v357 = vmul.f32 %v356, %v341
        %v358 = vadd.f32 %v354, %v357
        %vm359 = vcmask 64512
        %360 = vst.msk [vmem:[%s219] sm:$0xff] %vm359, %v358
        %s361 = sld [smem:[#allocation6 + $0x80]]
        %v362 = vstv %s361
        %v363 = vmul.f32 %v362, %v326
        %s364 = sld [smem:[#allocation6 + $0x81]]
        %v365 = vstv %s364
        %v366 = vmul.f32 %v365, %v331
        %v367 = vadd.f32 %v363, %v366
        %s368 = sld [smem:[#allocation6 + $0x82]]
        %v369 = vstv %s368
        %v370 = vmul.f32 %v369, %v336
        %v371 = vadd.f32 %v367, %v370
        %s372 = sld [smem:[#allocation6 + $0x83]]
        %v373 = vstv %s372
        %v374 = vmul.f32 %v373, %v341
        %v375 = vadd.f32 %v371, %v374
        %s376 = scalar_lea.vmem %s219, 8 [#allocation7]
        %377 = vst.msk [vmem:[%s376] sm:$0xff] %vm359, %v375
        %s378 = sld [smem:[#allocation6 + $0x100]]
        %v379 = vstv %s378
        %v380 = vmul.f32 %v379, %v326
        %s381 = sld [smem:[#allocation6 + $0x101]]
        %v382 = vstv %s381
        %v383 = vmul.f32 %v382, %v331
        %v384 = vadd.f32 %v380, %v383
        %s385 = sld [smem:[#allocation6 + $0x102]]
        %v386 = vstv %s385
        %v387 = vmul.f32 %v386, %v336
        %v388 = vadd.f32 %v384, %v387
        %s389 = sld [smem:[#allocation6 + $0x103]]
        %v390 = vstv %s389
        %v391 = vmul.f32 %v390, %v341
        %v392 = vadd.f32 %v388, %v391
        %s393 = scalar_lea.vmem %s219, 16 [#allocation7]
        %394 = vst.msk [vmem:[%s393] sm:$0xff] %vm359, %v392
        %s395 = sld [smem:[#allocation6 + $0x180]]
        %v396 = vstv %s395
        %v397 = vmul.f32 %v396, %v326
        %s398 = sld [smem:[#allocation6 + $0x181]]
        %v399 = vstv %s398
        %v400 = vmul.f32 %v399, %v331
        %v401 = vadd.f32 %v397, %v400
        %s402 = sld [smem:[#allocation6 + $0x182]]
        %v403 = vstv %s402
        %v404 = vmul.f32 %v403, %v336
        %v405 = vadd.f32 %v401, %v404
        %s406 = sld [smem:[#allocation6 + $0x183]]
        %v407 = vstv %s406
        %v408 = vmul.f32 %v407, %v341
        %v409 = vadd.f32 %v405, %v408
        %s410 = scalar_lea.vmem %s219, 24 [#allocation7]
        %411 = vst.msk [vmem:[%s410] sm:$0xff] %vm359, %v409
        %s412 = sld [smem:[#allocation6 + $0x200]]
        %v413 = vstv %s412
        %v414 = vmul.f32 %v413, %v326
        %s415 = sld [smem:[#allocation6 + $0x201]]
        %v416 = vstv %s415
        %v417 = vmul.f32 %v416, %v331
        %v418 = vadd.f32 %v414, %v417
        %s419 = sld [smem:[#allocation6 + $0x202]]
        %v420 = vstv %s419
        %v421 = vmul.f32 %v420, %v336
        %v422 = vadd.f32 %v418, %v421
        %s423 = sld [smem:[#allocation6 + $0x203]]
        %v424 = vstv %s423
        %v425 = vmul.f32 %v424, %v341
        %v426 = vadd.f32 %v422, %v425
        %s427 = scalar_lea.vmem %s219, 32 [#allocation7]
        %428 = vst.msk [vmem:[%s427] sm:$0xff] %vm359, %v426
        %s429 = sld [smem:[#allocation6 + $0x280]]
        %v430 = vstv %s429
        %v431 = vmul.f32 %v430, %v326
        %s432 = sld [smem:[#allocation6 + $0x281]]
        %v433 = vstv %s432
        %v434 = vmul.f32 %v433, %v331
        %v435 = vadd.f32 %v431, %v434
        %s436 = sld [smem:[#allocation6 + $0x282]]
        %v437 = vstv %s436
        %v438 = vmul.f32 %v437, %v336
        %v439 = vadd.f32 %v435, %v438
        %s440 = sld [smem:[#allocation6 + $0x283]]
        %v441 = vstv %s440
        %v442 = vmul.f32 %v441, %v341
        %v443 = vadd.f32 %v439, %v442
        %s444 = scalar_lea.vmem %s219, 40 [#allocation7]
        %445 = vst.msk [vmem:[%s444] sm:$0xff] %vm359, %v443
        %s446 = sld [smem:[#allocation6 + $0x300]]
        %v447 = vstv %s446
        %v448 = vmul.f32 %v447, %v326
        %s449 = sld [smem:[#allocation6 + $0x301]]
        %v450 = vstv %s449
        %v451 = vmul.f32 %v450, %v331
        %v452 = vadd.f32 %v448, %v451
        %s453 = sld [smem:[#allocation6 + $0x302]]
        %v454 = vstv %s453
        %v455 = vmul.f32 %v454, %v336
        %v456 = vadd.f32 %v452, %v455
        %s457 = sld [smem:[#allocation6 + $0x303]]
        %v458 = vstv %s457
        %v459 = vmul.f32 %v458, %v341
        %v460 = vadd.f32 %v456, %v459
        %s461 = scalar_lea.vmem %s219, 48 [#allocation7]
        %462 = vst.msk [vmem:[%s461] sm:$0xff] %vm359, %v460
        %s463 = sld [smem:[#allocation6 + $0x380]]
        %v464 = vstv %s463
        %v465 = vmul.f32 %v464, %v326
        %s466 = sld [smem:[#allocation6 + $0x381]]
        %v467 = vstv %s466
        %v468 = vmul.f32 %v467, %v331
        %v469 = vadd.f32 %v465, %v468
        %s470 = sld [smem:[#allocation6 + $0x382]]
        %v471 = vstv %s470
        %v472 = vmul.f32 %v471, %v336
        %v473 = vadd.f32 %v469, %v472
        %s474 = sld [smem:[#allocation6 + $0x383]]
        %v475 = vstv %s474
        %v476 = vmul.f32 %v475, %v341
        %v477 = vadd.f32 %v473, %v476
        %s478 = scalar_lea.vmem %s219, 56 [#allocation7]
        %479 = vst.msk [vmem:[%s478] sm:$0xff] %vm359, %v477
        %s480 = sand.u32 %s113, 1
        %s481 = scalar_lea.sflag [#allocation4], %s480
        %s482 = sand.u32 %s113, 1
        %s483 = smul.addr %s482, 64
        %s484 = scalar_lea.vmem [#allocation7], %s483
        // Predicated region
        $region41: #{tpu_custom_call.1} parent=31 // pred_check
          %p485 = pneg %p123
        $region42: #{tpu_custom_call.1} parent=31 // pred_check_branch
          %487 = sbr.rel (%p485) target = $region44
        $region43: #{tpu_custom_call.1} parent=31 // pred_region
          %s489 = ssub.s32 1024, 1024
          %490 = vsyncadd %s481, %s489
          %s491 = smul.addr %s25, 8
          %s492 = sadd.s32 %s26, %s491
          %s493 = smul.addr %s492, 128
          %s494 = scalar_lea.hbm %s3, %s493
          %s495 = sshll.u32 %s484, 4
          %s496 = int_to_ptr.vmem [resolvable:$true] %s495
          %501 = dma.vmem_to_hbm [thread:$0]  %s496, 1024, %s494, %s481, 128, 128, 8
        $region44: #{tpu_custom_call.1} parent=31 // pred_fallthru
          _
      $region32: #{tpu_custom_call.1} parent=5 // pred_fallthru
        _
      %p502 = scmp.le.s32.totalorder 2, %s16
      // Predicated region
      $region45: #{tpu_custom_call.1} parent=5 // pred_check
        %p503 = pneg %p502
      $region46: #{tpu_custom_call.1} parent=5 // pred_check_branch
        %505 = sbr.rel (%p503) target = $region48
      $region47: #{tpu_custom_call.1} parent=5 // pred_region
        %s506 = ssub.s32 %s16, 2
        // Predicated region
        $region49: #{tpu_custom_call.1} parent=47 // pred_check
          %p507 = pneg %p129
        $region50: #{tpu_custom_call.1} parent=47 // pred_check_branch
          %509 = sbr.rel (%p507) target = $region52
        $region51: #{tpu_custom_call.1} parent=47 // pred_region
          %s510 = sand.u32 %s114, 1
          %s511 = scalar_lea.sflag [#allocation4], %s510
          %s512 = sand.u32 %s114, 1
          %s513 = smul.addr %s512, 64
          %s514 = scalar_lea.vmem [#allocation7], %s513
          %515 = dma.done %s511, 1024
        $region52: #{tpu_custom_call.1} parent=47 // pred_fallthru
          _
      $region48: #{tpu_custom_call.1} parent=5 // pred_fallthru
        _
    $region6: #{tpu_custom_call.1} parent=1 // loop_footer
      %s20 = sadd.s32 1, %s16
    $region7: #{tpu_custom_call.1} parent=1 // loop_footer_branch
      %15 = sbr.rel target = $region3
    $region8: #{tpu_custom_call.1} parent=1 // loop_exit
      _
    %516 = vsyncpa [#allocation3], 1
    %s517 = scalar_lea.sflag [#allocation3], 1
    %518 = vsyncpa %s517, 1
    %519 = vsyncpa [#allocation4], 1
    %s520 = scalar_lea.sflag [#allocation4], 1
    %521 = vsyncpa %s520, 1
    %522 = vsyncpa [#allocation5], 1
    %s523 = scalar_lea.sflag [#allocation5], 1
    %524 = vsyncpa %s523, 1

</llo_original>
